<compile_context>
chip_gen: v5e
topology: v5e:2x2
jax: 0.10.0
libtpu: 0.0.40
codegen_flags: <defaults>
</compile_context>

<pallas_src>
import jax
import jax.numpy as jnp
import numpy as np
from jax.experimental import pallas as pl
from jax.experimental.pallas import tpu as pltpu


def _round_up(a, m):
    return ((a + m - 1) // m) * m


# ----------------------------------------------------------------------------
# Pallas kernel: fused (gate matmul -> LSTM cell (t=0) -> output Linear)
# ----------------------------------------------------------------------------
def lstm_kernel(x_ref, wih_ref, b_ref, fcw_ref, fcb_ref, out_ref):
    f32 = jnp.float32
    H = fcw_ref.shape[0]

    # Gate matmul: bf16 operands straight into the MXU, f32 accumulate; the
    # folded (b_ih + b_hh) bias is added to the f32 accumulator output.
    gates = jnp.dot(x_ref[...], wih_ref[...], preferred_element_type=f32) + b_ref[...]

    # Packed gate order is [i, o, g]; the f-gate was dropped host-side
    # (seq_len == 1 and c0 == 0 -> f * c0 == 0).  One contiguous sigmoid slice
    # and one adjacent tanh slice.
    sig = jax.nn.sigmoid(gates[:, : 2 * H])
    i_gate = sig[:, :H]
    o_gate = sig[:, H: 2 * H]
    g_gate = jnp.tanh(gates[:, 2 * H:])

    c = i_gate * g_gate                       # (Bt, H)  f32
    h = o_gate * jnp.tanh(c)                  # (Bt, H)  f32

    out = jnp.dot(h.astype(fcw_ref.dtype), fcw_ref[...],
                  preferred_element_type=f32) + fcb_ref[...]
    out_ref[...] = out.astype(out_ref.dtype)


# ----------------------------------------------------------------------------
# Wrapper: host-side weight prep + batch-tiled pallas_call
# ----------------------------------------------------------------------------
def lstm_forward(x, params, *, block_b=256):
    B, D = x.shape
    O, H = params["fc_w"].shape
    bf16 = jnp.bfloat16
    f32 = jnp.float32

    # --- host-side layout work (done exactly once) ---
    # PyTorch gate order in W_ih / biases is [i, f, g, o]; keep only [i, o, g].
    wih = params["wih"]                                              # (4H, D)
    wih_iog = jnp.concatenate(
        [wih[0 * H:1 * H], wih[3 * H:4 * H], wih[2 * H:3 * H]], axis=0)   # (3H, D)
    wih_t = wih_iog.T.astype(bf16)                                   # (D, 3H) bf16

    b_all = params["bih"] + params["bhh"]                            # (4H,)
    b = jnp.concatenate(
        [b_all[0 * H:1 * H], b_all[3 * H:4 * H], b_all[2 * H:3 * H]]
    ).reshape(1, 3 * H).astype(f32)                                  # (1, 3H) f32

    # Lane-dense output: pad fc out-dim to a multiple of 128.
    Op = _round_up(O, 128)
    fcw_t = jnp.zeros((H, Op), bf16).at[:, :O].set(params["fc_w"].T.astype(bf16))
    fcb = jnp.zeros((1, Op), f32).at[:, :O].set(params["fc_b"].astype(f32))

    # Batch tiling: 8-aligned tiles; guarantee >= 2 tiles when B > 8 so the
    # "parallel" grid axis can be sharded across v7x's two TensorCores.
    bt = min(block_b, max(8, _round_up(pl.cdiv(B, 2), 8)))
    Bp = _round_up(B, bt)
    xp = x.astype(bf16)
    if Bp != B:
        xp = jnp.pad(xp, ((0, Bp - B), (0, 0)))
    grid = (Bp // bt,)

    cost = pl.CostEstimate(
        flops=2 * Bp * (D * 3 * H + H * Op),
        transcendentals=4 * Bp * H,
        bytes_accessed=2 * (Bp * D + D * 3 * H + H * Op)        # bf16 tensors
                       + 4 * (3 * H + Op + Bp * Op),            # f32 biases + out
    )

    out = pl.pallas_call(
        lstm_kernel,
        out_shape=jax.ShapeDtypeStruct((Bp, Op), f32),
        grid_spec=pltpu.PrefetchScalarGridSpec(
            num_scalar_prefetch=0,
            grid=grid,
            in_specs=[
                pl.BlockSpec((bt, D), lambda i: (i, 0)),          # x tile (bf16)
                pl.BlockSpec((D, 3 * H), lambda i: (0, 0)),       # W_ih^T [i,o,g] (resident)
                pl.BlockSpec((1, 3 * H), lambda i: (0, 0)),       # folded bias
                pl.BlockSpec((H, Op), lambda i: (0, 0)),          # W_fc^T (lane-padded)
                pl.BlockSpec((1, Op), lambda i: (0, 0)),          # fc bias (lane-padded)
            ],
            out_specs=pl.BlockSpec((bt, Op), lambda i: (i, 0)),
        ),
        compiler_params=pltpu.CompilerParams(
            dimension_semantics=("parallel",),
            vmem_limit_bytes=32 * 1024 * 1024,
        ),
        cost_estimate=cost,
    )(xp, wih_t, b, fcw_t, fcb)

    return out[:B, :O]


# ----------------------------------------------------------------------------
# Pure-JAX reference (mirrors the PyTorch forward exactly, f32 throughout)
# ----------------------------------------------------------------------------
def reference_forward(x, params):
    H = params["whh"].shape[1]
    # seq_len == 1, h0 == c0 == 0
    g = x @ params["wih"].T + params["bih"] + params["bhh"]
    i = jax.nn.sigmoid(g[:, 0 * H:1 * H])
    f = jax.nn.sigmoid(g[:, 1 * H:2 * H])
    gg = jnp.tanh(g[:, 2 * H:3 * H])
    o = jax.nn.sigmoid(g[:, 3 * H:4 * H])
    c = f * jnp.zeros_like(gg) + i * gg
    h = o * jnp.tanh(c)
    return h @ params["fc_w"].T + params["fc_b"]


# ----------------------------------------------------------------------------
def init_params(key, input_size, hidden_size, output_size):
    D, H, O = input_size, hidden_size, output_size
    ks = jax.random.split(key, 6)
    u = lambda k, shape, bound: jax.random.uniform(k, shape, jnp.float32, -bound, bound)
    kl = 1.0 / np.sqrt(H)
    return {
        "wih": u(ks[0], (4 * H, D), kl),
        "whh": u(ks[1], (4 * H, H), kl),   # module parity; zero contribution at seq_len=1
        "bih": u(ks[2], (4 * H,), kl),
        "bhh": u(ks[3], (4 * H,), kl),
        "fc_w": u(ks[4], (O, H), kl),
        "fc_b": u(ks[5], (O,), kl),
    }


if __name__ == "__main__":
    # Small shapes consistent with the module: batch=2, input_size=16,
    # hidden_size=32, output_size=4.
    B, D, H, O = 2, 16, 32, 4

    key = jax.random.PRNGKey(0)
    kx, kp = jax.random.split(key)
    x = jax.random.normal(kx, (B, D), jnp.float32)
    params = init_params(kp, D, H, O)

    out = jax.block_until_ready(lstm_forward(x, params))
    ref = jax.block_until_ready(reference_forward(x, params))

    assert out.shape == (B, O), out.shape
    err = float(jnp.max(jnp.abs(out - ref)))
    assert np.allclose(np.asarray(out), np.asarray(ref), atol=2e-2, rtol=2e-2), \
        f"mismatch, max abs err = {err}"

    print("KERNEL_OK")
</pallas_src>

<mosaic_0001>
module attributes {stable_mosaic.version = 11 : i64} {
  func.func @lstm_kernel(%arg0: i32, %arg1: memref<8x16xbf16, #tpu.memory_space<vmem>>, %arg2: memref<16x96xbf16, #tpu.memory_space<vmem>>, %arg3: memref<1x96xf32, #tpu.memory_space<vmem>>, %arg4: memref<32x128xbf16, #tpu.memory_space<vmem>>, %arg5: memref<1x128xf32, #tpu.memory_space<vmem>>, %arg6: memref<8x128xf32, #tpu.memory_space<vmem>>) attributes {dimension_semantics = [#tpu.dimension_semantics<parallel>], iteration_bounds = array<i64: 1>, scalar_prefetch = 0 : i64, scratch_operands = 0 : i64, tpu.core_type = #tpu.core_type<tc>, window_params = [{transform_indices = @transform_0, window_bounds = array<i64: 8, 16>}, {pipeline_mode = #tpu.pipeline_mode<synchronous>, transform_indices = @transform_1, window_bounds = array<i64: 16, 96>}, {pipeline_mode = #tpu.pipeline_mode<synchronous>, transform_indices = @transform_2, window_bounds = array<i64: 1, 96>}, {pipeline_mode = #tpu.pipeline_mode<synchronous>, transform_indices = @transform_3, window_bounds = array<i64: 32, 128>}, {pipeline_mode = #tpu.pipeline_mode<synchronous>, transform_indices = @transform_4, window_bounds = array<i64: 1, 128>}, {transform_indices = @transform_5, window_bounds = array<i64: 8, 128>}]} {
    %c0 = arith.constant 0 : index
    %c0_0 = arith.constant 0 : index
    %0 = vector.load %arg1[%c0, %c0_0] : memref<8x16xbf16, #tpu.memory_space<vmem>>, vector<8x16xbf16>
    %c0_1 = arith.constant 0 : index
    %c0_2 = arith.constant 0 : index
    %1 = vector.load %arg2[%c0_1, %c0_2] : memref<16x96xbf16, #tpu.memory_space<vmem>>, vector<16x96xbf16>
    %cst = arith.constant dense<0.000000e+00> : vector<8x96xf32>
    %2 = tpu.matmul %0, %1, %cst {dimension_numbers = #tpu.dot_dimension_numbers<[1], [0], [0], [1], [0, 0, 1, 1], [], []>} : vector<8x16xbf16>, vector<16x96xbf16>, vector<8x96xf32> -> vector<8x96xf32>
    %c0_3 = arith.constant 0 : index
    %c0_4 = arith.constant 0 : index
    %3 = vector.load %arg3[%c0_3, %c0_4] : memref<1x96xf32, #tpu.memory_space<vmem>>, vector<1x96xf32>
    %4 = vector.broadcast %3 : vector<1x96xf32> to vector<8x96xf32>
    %5 = arith.addf %2, %4 : vector<8x96xf32>
    %6 = vector.extract_strided_slice %5 {offsets = [0, 0], sizes = [8, 64], strides = [1, 1]} : vector<8x96xf32> to vector<8x64xf32>
    %7 = arith.negf %6 : vector<8x64xf32>
    %8 = math.exp %7 : vector<8x64xf32>
    %cst_5 = arith.constant 1.000000e+00 : f32
    %9 = vector.broadcast %cst_5 : f32 to vector<8x64xf32>
    %10 = arith.addf %9, %8 : vector<8x64xf32>
    %11 = arith.divf %9, %10 : vector<8x64xf32>
    %12 = vector.extract_strided_slice %11 {offsets = [0, 0], sizes = [8, 32], strides = [1, 1]} : vector<8x64xf32> to vector<8x32xf32>
    %13 = vector.extract_strided_slice %11 {offsets = [0, 32], sizes = [8, 32], strides = [1, 1]} : vector<8x64xf32> to vector<8x32xf32>
    %14 = vector.extract_strided_slice %5 {offsets = [0, 64], sizes = [8, 32], strides = [1, 1]} : vector<8x96xf32> to vector<8x32xf32>
    %15 = math.tanh %14 : vector<8x32xf32>
    %16 = arith.mulf %12, %15 : vector<8x32xf32>
    %17 = math.tanh %16 : vector<8x32xf32>
    %18 = arith.mulf %13, %17 : vector<8x32xf32>
    %19 = arith.truncf %18 : vector<8x32xf32> to vector<8x32xbf16>
    %c0_6 = arith.constant 0 : index
    %c0_7 = arith.constant 0 : index
    %20 = vector.load %arg4[%c0_6, %c0_7] : memref<32x128xbf16, #tpu.memory_space<vmem>>, vector<32x128xbf16>
    %cst_8 = arith.constant dense<0.000000e+00> : vector<8x128xf32>
    %21 = tpu.matmul %19, %20, %cst_8 {dimension_numbers = #tpu.dot_dimension_numbers<[1], [0], [0], [1], [0, 0, 1, 1], [], []>} : vector<8x32xbf16>, vector<32x128xbf16>, vector<8x128xf32> -> vector<8x128xf32>
    %c0_9 = arith.constant 0 : index
    %c0_10 = arith.constant 0 : index
    %22 = vector.load %arg5[%c0_9, %c0_10] : memref<1x128xf32, #tpu.memory_space<vmem>>, vector<1x128xf32>
    %23 = vector.broadcast %22 : vector<1x128xf32> to vector<8x128xf32>
    %24 = arith.addf %21, %23 : vector<8x128xf32>
    %c0_11 = arith.constant 0 : index
    %c0_12 = arith.constant 0 : index
    %25 = vector.load %arg6[%c0_11, %c0_12] : memref<8x128xf32, #tpu.memory_space<vmem>>, vector<8x128xf32>
    tpu.vector_store %arg6[%c0_11, %c0_12], %24 {strides = array<i32>} : memref<8x128xf32, #tpu.memory_space<vmem>>, vector<8x128xf32>,
    return
  }
  func.func @transform_0(%arg0: i32) -> (i32, i32) {
    %c0_i32 = arith.constant 0 : i32
    %c0_i32_0 = arith.constant 0 : i32
    return %arg0, %c0_i32 : i32, i32
  }
  func.func @transform_1(%arg0: i32) -> (i32, i32) {
    %c0_i32 = arith.constant 0 : i32
    %c0_i32_0 = arith.constant 0 : i32
    %c0_i32_1 = arith.constant 0 : i32
    return %c0_i32, %c0_i32_0 : i32, i32
  }
  func.func @transform_2(%arg0: i32) -> (i32, i32) {
    %c0_i32 = arith.constant 0 : i32
    %c0_i32_0 = arith.constant 0 : i32
    %c0_i32_1 = arith.constant 0 : i32
    return %c0_i32, %c0_i32_0 : i32, i32
  }
  func.func @transform_3(%arg0: i32) -> (i32, i32) {
    %c0_i32 = arith.constant 0 : i32
    %c0_i32_0 = arith.constant 0 : i32
    %c0_i32_1 = arith.constant 0 : i32
    return %c0_i32, %c0_i32_0 : i32, i32
  }
  func.func @transform_4(%arg0: i32) -> (i32, i32) {
    %c0_i32 = arith.constant 0 : i32
    %c0_i32_0 = arith.constant 0 : i32
    %c0_i32_1 = arith.constant 0 : i32
    return %c0_i32, %c0_i32_0 : i32, i32
  }
  func.func @transform_5(%arg0: i32) -> (i32, i32) {
    %c0_i32 = arith.constant 0 : i32
    %c0_i32_0 = arith.constant 0 : i32
    return %arg0, %c0_i32 : i32, i32
  }
}

</mosaic_0001>

<llo_original>
// kernel: tpu_custom_call.1
$region0: #{tpu_custom_call.1}
  #allocation0 [shape = 'u32[]', space=smem, size = 0x4, offset = 0x4, fixed_abs, tag = 'smem constant byte address 0x4 - core index']
  #allocation1 [shape = 'u32[72,128]{1,0:T(1,128)}', space=vmem, size = 0x9000, scoped, tag = 'internal scratch']
  %s0 = inlined_call_operand.hbm [shape: bf16[8,16], index: 0, kind: input, shape index: {}]
  %s1 = inlined_call_operand.hbm [shape: bf16[16,96], index: 1, kind: input, shape index: {}]
  %s2 = inlined_call_operand.vmem [shape: f32[1,96], index: 2, kind: input, shape index: {}]
  %s3 = inlined_call_operand.hbm [shape: bf16[32,128], index: 3, kind: input, shape index: {}]
  %s4 = inlined_call_operand.vmem [shape: f32[1,128], index: 4, kind: input, shape index: {}]
  %s5 = inlined_call_operand.hbm [shape: f32[8,128], index: 5, kind: output, shape index: {}]
  %s6 = sld [smem:[#allocation0]]
  $region42: #{tpu_custom_call.1} parent=0
    _
  %s8 = ssub.s32 1, %s6
  %s9 = scalar_select 0, %s8, %s6
  $region1: #{tpu_custom_call.1} parent=0
    #allocation2 [shape = 'u8[2048]{0}', space=vmem, size = 0x800, scoped, tag = 'input window, operand 0, single buffered']
    #allocation3 [shape = 's32[1]{0}', space=sflag, size = 0x4, scoped, tag = 'scoped memory for tpu_custom_call.1']
    #allocation4 [shape = 's32[1]{0}', space=sflag, size = 0x4, scoped, tag = 'scoped memory for tpu_custom_call.1']
    #allocation5 [shape = 'u8[4096]{0}', space=vmem, size = 0x1000, scoped, tag = 'input window, operand 1, single buffered']
    #allocation6 [shape = 's32[1]{0}', space=sflag, size = 0x4, scoped, tag = 'scoped memory for tpu_custom_call.1']
    #allocation7 [shape = 'u8[8192]{0}', space=vmem, size = 0x2000, scoped, tag = 'input window, operand 3, single buffered']
    #allocation8 [shape = 'u8[4096]{0}', space=vmem, size = 0x1000, scoped, tag = 'output window, operand 0, single buffered']
    %10 = vsyncpa [#allocation3], 0
    %11 = vsyncpa [#allocation6], 0
    %12 = vsyncpa [#allocation4], 0
    // Predicated region
    $region2: #{tpu_custom_call.1} parent=1 // pred_check
      _
    $region3: #{tpu_custom_call.1} parent=1 // pred_check_branch
      %14 = sbr.rel (0) target = $region5
    $region4: #{tpu_custom_call.1} parent=1 // pred_region
      %16 = vsyncadd [#allocation3], 0
      %s18 = sshll.u32 %s0, 4
      %s19 = int_to_ptr.hbm [resolvable:$true] %s18
      %s20 = sshll.u32 [#allocation2], 4
      %s21 = int_to_ptr.vmem [resolvable:$true] %s20
      %23 = dma.hbm_to_vmem [thread:$0]  %s19, 64, %s21, [#allocation3]
    $region5: #{tpu_custom_call.1} parent=1 // pred_fallthru
      _
    // Predicated region
    $region6: #{tpu_custom_call.1} parent=1 // pred_check
      _
    $region7: #{tpu_custom_call.1} parent=1 // pred_check_branch
      %25 = sbr.rel (0) target = $region9
    $region8: #{tpu_custom_call.1} parent=1 // pred_region
      %27 = vsyncadd [#allocation6], 0
      %s28 = sshll.u32 %s1, 4
      %s29 = int_to_ptr.hbm [resolvable:$true] %s28
      %s30 = sshll.u32 [#allocation5], 4
      %s31 = int_to_ptr.vmem [resolvable:$true] %s30
      %36 = dma.hbm_to_vmem [thread:$0]  %s29, 128, %s31, [#allocation6], 64, 64, 4
    $region9: #{tpu_custom_call.1} parent=1 // pred_fallthru
      _
    // Predicated region
    $region10: #{tpu_custom_call.1} parent=1 // pred_check
      _
    $region11: #{tpu_custom_call.1} parent=1 // pred_check_branch
      %38 = sbr.rel (0) target = $region13
    $region12: #{tpu_custom_call.1} parent=1 // pred_region
      _
    $region13: #{tpu_custom_call.1} parent=1 // pred_fallthru
      _
    // Predicated region
    $region14: #{tpu_custom_call.1} parent=1 // pred_check
      _
    $region15: #{tpu_custom_call.1} parent=1 // pred_check_branch
      %40 = sbr.rel (0) target = $region17
    $region16: #{tpu_custom_call.1} parent=1 // pred_region
      %42 = vsyncadd [#allocation6], 0
      %s43 = sshll.u32 %s3, 4
      %s44 = int_to_ptr.hbm [resolvable:$true] %s43
      %s45 = sshll.u32 [#allocation7], 4
      %s46 = int_to_ptr.vmem [resolvable:$true] %s45
      %51 = dma.hbm_to_vmem [thread:$0]  %s44, 256, %s46, [#allocation6], 64, 64, 4
    $region17: #{tpu_custom_call.1} parent=1 // pred_fallthru
      _
    // Predicated region
    $region18: #{tpu_custom_call.1} parent=1 // pred_check
      _
    $region19: #{tpu_custom_call.1} parent=1 // pred_check_branch
      %53 = sbr.rel (0) target = $region21
    $region20: #{tpu_custom_call.1} parent=1 // pred_region
      _
    $region21: #{tpu_custom_call.1} parent=1 // pred_fallthru
      _
    // Predicated region
    $region22: #{tpu_custom_call.1} parent=1 // pred_check
      _
    $region23: #{tpu_custom_call.1} parent=1 // pred_check_branch
      %55 = sbr.rel (0) target = $region25
    $region24: #{tpu_custom_call.1} parent=1 // pred_region
      %57 = dma.done [#allocation3], 64
    $region25: #{tpu_custom_call.1} parent=1 // pred_fallthru
      _
    // Predicated region
    $region26: #{tpu_custom_call.1} parent=1 // pred_check
      _
    $region27: #{tpu_custom_call.1} parent=1 // pred_check_branch
      %59 = sbr.rel (0) target = $region29
    $region28: #{tpu_custom_call.1} parent=1 // pred_region
      %61 = dma.done [#allocation6], 128
    $region29: #{tpu_custom_call.1} parent=1 // pred_fallthru
      _
    // Predicated region
    $region30: #{tpu_custom_call.1} parent=1 // pred_check
      _
    $region31: #{tpu_custom_call.1} parent=1 // pred_check_branch
      %63 = sbr.rel (0) target = $region33
    $region32: #{tpu_custom_call.1} parent=1 // pred_region
      %65 = dma.done [#allocation6], 256
    $region33: #{tpu_custom_call.1} parent=1 // pred_fallthru
      _
    %v67 = vld [vmem:[#allocation2] sm:$0xf]
    %v68 = vld [vmem:[#allocation5] sm:$0xf]
    %v69 = vld [vmem:[#allocation5 + $0x4] sm:$0xf]
    %v70 = vld [vmem:[%s2] sm:$0x1]
    %v72 = vperm.slane %v70, 0
    %v76 = vunpack.c.l.b16 %v68
    %v77 = vunpack.c.l.b16 %v69
    %v78 = vpack.c.b16 %v77, %v76
    %vm80 = vcmask 130048
    %v82 = vsel %vm80, %v67, 0
    %84 = vmatpush.bf16.msra.mxu0 0
    %85 = vmatpush.bf16.msra.mxu0 0
    %86 = vmatpush.bf16.msra.mxu0 0
    %87 = vmatpush.bf16.msra.mxu0 0
    %88 = vmatpush.bf16.msra.mxu0 0
    %89 = vmatpush.bf16.msra.mxu0 0
    %90 = vmatpush.bf16.msra.mxu0 0
    %91 = vmatpush.bf16.msra.mxu0 %v78
    %92 = vmatmul.bf16.gmra.mxu0 %v82
    %v93 = vpop.f32.mrf.mxu0
    %v94 = vadd.f32 %v72, %v93
    %v95 = vpop.f32.mrf.mxu0
    %96 = vdwg.mxu0
    %v97 = vxor.u32 %v94, 2147483648
    %v98 = vmul.f32 %v97, 1.442695
    %v99 = vpow.pop %v98
    %v100 = vadd.f32 %v99, 1.0
    %v101 = vrcp.pop %v100
    %v102 = vmul.f32 %v100, %v101
    %v103 = vsub.f32 1.0, %v102
    %v104 = vmul.f32 %v101, %v103
    %v105 = vadd.f32 %v101, %v104
    %vm106 = vweird.f32 %v100
    %vm107 = vweird.f32 %v101
    %vm108 = vmor %vm106, %vm107
    %v109 = vsel %vm108, %v101, %v105
    %v110 = vand.u32 2147483647, %v100
    %vm111 = vcmp.eq.f32.partialorder %v110, 8.507059e+37
    %v112 = vand.u32 %v100, 2147483648
    %v113 = vor.u32 1.1754944e-38, %v112
    %v114 = vsel %vm111, %v113, %v109
    %v115 = vmul.f32 1.0, %v114
    %v116 = vtanh.pop %v94
    %118 = vrot.lane.b32.xlu0 %v116, 64
    %v119 = vpop.permute.xlu0 %118
    %v121 = vmul.f32 %v115, %v119
    %v122 = vtanh.pop %v121
    %124 = vrot.lane.b32.xlu0 %v122, 32
    %v125 = vpop.permute.xlu0 %124
    %v127 = vmul.f32 %v115, %v125
    %v128 = vpack.c.bf16 %v127, %v127
    %v129 = vld [vmem:[#allocation7] sm:$0xf]
    %v130 = vld [vmem:[#allocation7 + $0x4] sm:$0xf]
    %v131 = vld [vmem:[#allocation7 + $0x8] sm:$0xf]
    %v132 = vld [vmem:[#allocation7 + $0xc] sm:$0xf]
    %v133 = vld [vmem:[%s4] sm:$0x1]
    %v135 = vperm.slane %v133, 0
    %138 = vrot.lane.b32.xlu0 %v128, 96
    %v139 = vpop.permute.xlu0 %138
    %v144 = vunpack.c.l.b16 %v129
    %v145 = vunpack.c.l.b16 %v130
    %v146 = vunpack.c.l.b16 %v131
    %v147 = vunpack.c.l.b16 %v132
    %v148 = vpack.c.b16 %v145, %v144
    %v149 = vpack.c.b16 %v147, %v146
    %vm152 = vcmask 261120
    %v154 = vsel %vm152, %v139, 0
    %156 = vmatpush.bf16.msra.mxu0 0
    %157 = vmatpush.bf16.msra.mxu0 0
    %158 = vmatpush.bf16.msra.mxu0 0
    %159 = vmatpush.bf16.msra.mxu0 0
    %160 = vmatpush.bf16.msra.mxu0 0
    %161 = vmatpush.bf16.msra.mxu0 0
    %162 = vmatpush.bf16.msra.mxu0 %v149
    %163 = vmatpush.bf16.msra.mxu0 %v148
    %164 = vmatmul.bf16.gmra.mxu0 %v154
    %v165 = vpop.f32.mrf.mxu0
    %v166 = vadd.f32 %v135, %v165
    %v167 = vpop.f32.mrf.mxu0
    %168 = vdwg.mxu0
    %169 = vst [vmem:[#allocation8] sm:$0xff] %v166
    // Predicated region
    $region34: #{tpu_custom_call.1} parent=1 // pred_check
      _
    $region35: #{tpu_custom_call.1} parent=1 // pred_check_branch
      %171 = sbr.rel (0) target = $region37
    $region36: #{tpu_custom_call.1} parent=1 // pred_region
      %173 = vsyncadd [#allocation4], 0
      %s175 = sshll.u32 [#allocation8], 4
      %s176 = int_to_ptr.vmem [resolvable:$true] %s175
      %s177 = sshll.u32 %s5, 4
      %s178 = int_to_ptr.hbm [resolvable:$true] %s177
      %180 = dma.vmem_to_hbm [thread:$0]  %s176, 128, %s178, [#allocation4]
    $region37: #{tpu_custom_call.1} parent=1 // pred_fallthru
      _
    // Predicated region
    $region38: #{tpu_custom_call.1} parent=1 // pred_check
      _
    $region39: #{tpu_custom_call.1} parent=1 // pred_check_branch
      %182 = sbr.rel (0) target = $region41
    $region40: #{tpu_custom_call.1} parent=1 // pred_region
      %184 = dma.done [#allocation4], 128
    $region41: #{tpu_custom_call.1} parent=1 // pred_fallthru
      _
    %185 = vsyncpa [#allocation3], 1
    %186 = vsyncpa [#allocation6], 1
    %187 = vsyncpa [#allocation4], 1

</llo_original>
